<compile_context>
chip_gen: v7x
topology: tpu7x:2x2x1
jax: 0.10.0
libtpu: 0.0.40
codegen_flags: <defaults>
</compile_context>

<pallas_src>
import functools

import jax
import jax.numpy as jnp
from jax.experimental import pallas as pl
from jax.experimental.pallas import tpu as pltpu

LANES = 128
TM_MAX = 4096     # rows per grid step -> 2 MiB f32 per input block
UNROLL = 4        # granules ((8,128) chunks) per visible fori_loop iteration


def _loss_sums_kernel(x_ref, t_ref, acc_ref, *, tm, unroll):
    """Accumulates 4 partial-sum slabs of shape (8, 128) into acc_ref.

    acc_ref[0] : sum of stable BCE-with-logits terms
    acc_ref[1] : sum sigmoid(x) * t   (dice intersection)
    acc_ref[2] : sum sigmoid(x)
    acc_ref[3] : sum t
    """
    i = pl.program_id(1)

    @pl.when(i == 0)
    def _():
        acc_ref[...] = jnp.zeros_like(acc_ref)

    n_gran = tm // 8

    def body(j, carry):
        b_acc, i_acc, p_acc, t_acc = carry
        start = pl.multiple_of(j * 8, 8)
        x = x_ref[pl.ds(start, 8), :].astype(jnp.float32)
        t = t_ref[pl.ds(start, 8), :].astype(jnp.float32)

        # Shared transcendental: th = tanh(x/2) drives both sigmoid and BCE.
        th = jnp.tanh(0.5 * x)                    # EUP
        p = 0.5 + 0.5 * th                        # sigmoid(x)
        s = 0.5 + 0.5 * jnp.abs(th)               # sigmoid(|x|)
        # Numerically stable BCE-with-logits:
        #   loss = max(x, 0) - x*t + log1p(exp(-|x|))
        #        = max(x, 0) - x*t - log(sigmoid(|x|))
        bce = jnp.maximum(x, 0.0) - x * t - jnp.log(s)   # log: EUP

        return (b_acc + bce,
                i_acc + p * t,
                p_acc + p,
                t_acc + t)

    zeros = jnp.zeros((8, LANES), jnp.float32)
    b_s, i_s, p_s, t_s = jax.lax.fori_loop(
        0, n_gran, body, (zeros, zeros, zeros, zeros), unroll=unroll)

    acc_ref[0] += b_s
    acc_ref[1] += i_s
    acc_ref[2] += p_s
    acc_ref[3] += t_s


def _partial_sums_jax(x, t):
    """Same math as the kernel, for the (small) unaligned tail / tiny inputs."""
    x = x.astype(jnp.float32)
    t = t.astype(jnp.float32)
    th = jnp.tanh(0.5 * x)
    p = 0.5 + 0.5 * th
    s = 0.5 + 0.5 * jnp.abs(th)
    bce = jnp.maximum(x, 0.0) - x * t - jnp.log(s)
    return jnp.sum(bce), jnp.sum(p * t), jnp.sum(p), jnp.sum(t)


def _num_tensorcores():
    """1 on v5e/v6e (single TensorCore per device), 2 on v7x. Perf-only."""
    try:
        dev = jax.devices()[0]
        if getattr(dev, "platform", "") != "tpu":
            return 1
        kind = str(getattr(dev, "device_kind", "")).lower()
        if "v7" in kind or "tpu7" in kind:
            return 2
    except Exception:
        pass
    return 1


def _loss_sums(logits, targets):
    """Returns (bce_sum, intersection, sum_p, sum_t, n)."""
    n = logits.size
    x = logits.reshape(-1)       # keep native dtype; kernel casts per granule
    t = targets.reshape(-1)

    rows = n // LANES
    rem = n - rows * LANES

    tm = min(TM_MAX, (rows // 8) * 8)          # multiple of 8 (tile constraint)
    nblocks = (rows // tm) if tm >= 8 else 0

    if nblocks == 0:
        # Too small for a (8,128)-tiled kernel block: pure-JAX reduction.
        b_s, i_s, p_s, t_s = _partial_sums_jax(x, t)
        return b_s, i_s, p_s, t_s, n

    rows_main = nblocks * tm
    n_main = rows_main * LANES

    if rem == 0:
        # Zero-copy: bitcast reshape; the grid never touches rows >= rows_main.
        x2 = x.reshape(rows, LANES)
        t2 = t.reshape(rows, LANES)
    else:
        # n not a multiple of 128: a lane-dense 2-D view of the bulk needs a
        # (prefix-slice) copy; the remainder is handled in the JAX tail below.
        x2 = jax.lax.slice(x, (0,), (n_main,)).reshape(rows_main, LANES)
        t2 = jax.lax.slice(t, (0,), (n_main,)).reshape(rows_main, LANES)

    ncores = _num_tensorcores()
    nsplit = 2 if (ncores >= 2 and nblocks >= 2 and nblocks % 2 == 0) else 1
    bpc = nblocks // nsplit

    kernel = functools.partial(_loss_sums_kernel, tm=tm,
                               unroll=min(UNROLL, tm // 8))

    part = pl.pallas_call(
        kernel,
        out_shape=jax.ShapeDtypeStruct((nsplit, 4, 8, LANES), jnp.float32),
        grid_spec=pltpu.PrefetchScalarGridSpec(
            num_scalar_prefetch=0,
            grid=(nsplit, bpc),
            in_specs=[
                pl.BlockSpec((tm, LANES), lambda c, i: (c * bpc + i, 0)),
                pl.BlockSpec((tm, LANES), lambda c, i: (c * bpc + i, 0)),
            ],
            # Output block constant across the reduction axis -> VMEM-resident
            # accumulator (one (4,8,128) slab per parallel split).
            out_specs=pl.BlockSpec((None, 4, 8, LANES),
                                   lambda c, i: (c, 0, 0, 0)),
        ),
        compiler_params=pltpu.CompilerParams(
            dimension_semantics=("parallel", "arbitrary"),
        ),
    )(x2, t2)

    sums = jnp.sum(part, axis=(0, 2, 3))   # single cross-lane reduce here
    b_s, i_s, p_s, t_s = sums[0], sums[1], sums[2], sums[3]

    n_tail = n - n_main
    if n_tail > 0:
        tb, ti, tp, tt = _partial_sums_jax(jax.lax.slice(x, (n_main,), (n,)),
                                           jax.lax.slice(t, (n_main,), (n,)))
        b_s = b_s + tb
        i_s = i_s + ti
        p_s = p_s + tp
        t_s = t_s + tt

    return b_s, i_s, p_s, t_s, n


@functools.partial(jax.jit, static_argnums=(2,))
def combined_loss(logits, targets, is_dice_log):
    """Matches CombinedLoss.forward -> (l, bce_loss, dice_loss)."""
    bce_sum, intersection, sum_p, sum_t, n = _loss_sums(logits, targets)

    bce_loss = bce_sum / jnp.float32(n)

    smooth = jnp.float32(1e-05)
    score = (2.0 * intersection + smooth) / (sum_p + sum_t + smooth)
    dice_loss = -score

    if is_dice_log:
        l = bce_loss - jnp.log(-dice_loss)
    else:
        l = bce_loss + dice_loss
    return l, bce_loss, dice_loss


def _reference(logits, targets, is_dice_log):
    """Pure-JAX reference of the PyTorch module for a sanity check."""
    x = logits.reshape(-1).astype(jnp.float32)
    t = targets.reshape(-1).astype(jnp.float32)
    bce = jnp.mean(jnp.maximum(x, 0.0) - x * t + jnp.log1p(jnp.exp(-jnp.abs(x))))
    p = jax.nn.sigmoid(x)
    smooth = 1e-05
    inter = jnp.dot(p, t)
    union = jnp.sum(p) + jnp.sum(t)
    dice = -((2.0 * inter + smooth) / (union + smooth))
    l = bce - jnp.log(-dice) if is_dice_log else bce + dice
    return l, bce, dice


if __name__ == "__main__":
    key = jax.random.PRNGKey(0)
    k1, k2 = jax.random.split(key)
    # NCHW: batch=2, channels=4, spatial=16x16
    probs = jax.random.normal(k1, (2, 4, 16, 16), dtype=jnp.float32)
    targets = (jax.random.uniform(k2, (2, 4, 16, 16)) > 0.5).astype(jnp.float32)

    for is_dice_log in (True, False):
        l, bce, dice = combined_loss(probs, targets, is_dice_log)
        jax.block_until_ready((l, bce, dice))
        l_r, bce_r, dice_r = _reference(probs, targets, is_dice_log)
        assert jnp.allclose(l, l_r, atol=2e-5, rtol=2e-5), (l, l_r)
        assert jnp.allclose(bce, bce_r, atol=2e-5, rtol=2e-5), (bce, bce_r)
        assert jnp.allclose(dice, dice_r, atol=2e-5, rtol=2e-5), (dice, dice_r)

    # Also exercise a non-aligned shape (bulk kernel + pure-JAX tail path).
    k3, k4 = jax.random.split(k1)
    probs2 = jax.random.normal(k3, (2, 3, 17, 19), dtype=jnp.float32)
    targets2 = (jax.random.uniform(k4, (2, 3, 17, 19)) > 0.5).astype(jnp.float32)
    l2, bce2, dice2 = combined_loss(probs2, targets2, True)
    jax.block_until_ready((l2, bce2, dice2))
    l2r, bce2r, dice2r = _reference(probs2, targets2, True)
    assert jnp.allclose(l2, l2r, atol=2e-5, rtol=2e-5), (l2, l2r)
    assert jnp.allclose(bce2, bce2r, atol=2e-5, rtol=2e-5), (bce2, bce2r)
    assert jnp.allclose(dice2, dice2r, atol=2e-5, rtol=2e-5), (dice2, dice2r)

    print("KERNEL_OK")
</pallas_src>

<mosaic_0001>
module attributes {stable_mosaic.version = 11 : i64} {
  func.func @_loss_sums_kernel(%arg0: i32, %arg1: i32, %arg2: memref<16x128xf32, #tpu.memory_space<vmem>>, %arg3: memref<16x128xf32, #tpu.memory_space<vmem>>, %arg4: memref<1x4x8x128xf32, #tpu.memory_space<vmem>>) attributes {dimension_semantics = [#tpu.dimension_semantics<parallel>, #tpu.dimension_semantics<arbitrary>], iteration_bounds = array<i64: 1, 1>, scalar_prefetch = 0 : i64, scratch_operands = 0 : i64, tpu.core_type = #tpu.core_type<tc>, window_params = [{transform_indices = @transform_0, window_bounds = array<i64: 16, 128>}, {transform_indices = @transform_1, window_bounds = array<i64: 16, 128>}, {transform_indices = @transform_2, window_bounds = array<i64: 1, 4, 8, 128>}]} {
    %c0_i32 = arith.constant 0 : i32
    %0 = arith.cmpi eq, %arg1, %c0_i32 : i32
    %1 = arith.extui %0 : i1 to i32
    %c0_i32_0 = arith.constant 0 : i32
    %2 = arith.cmpi ne, %1, %c0_i32_0 : i32
    scf.if %2 {
      %cst_47 = arith.constant 0.000000e+00 : f32
      %86 = vector.broadcast %cst_47 : f32 to vector<4x8x128xf32>
      %c0_48 = arith.constant 0 : index
      %c0_49 = arith.constant 0 : index
      %c0_50 = arith.constant 0 : index
      %c0_51 = arith.constant 0 : index
      %87 = vector.load %arg4[%c0_48, %c0_49, %c0_50, %c0_51] : memref<1x4x8x128xf32, #tpu.memory_space<vmem>>, vector<1x4x8x128xf32>
      %88 = vector.shape_cast %87 : vector<1x4x8x128xf32> to vector<4x8x128xf32>
      %89 = vector.shape_cast %86 : vector<4x8x128xf32> to vector<1x4x8x128xf32>
      tpu.vector_store %arg4[%c0_48, %c0_49, %c0_50, %c0_51], %89 {strides = array<i32>} : memref<1x4x8x128xf32, #tpu.memory_space<vmem>>, vector<1x4x8x128xf32>,
    } else {
    }
    %cst = arith.constant 0.000000e+00 : f32
    %3 = vector.broadcast %cst : f32 to vector<8x128xf32>
    %c0_i32_1 = arith.constant 0 : i32
    %c8_i32 = arith.constant 8 : i32
    %4 = arith.muli %c0_i32_1, %c8_i32 : i32
    %5 = tpu.assume_multiple %4, 8 : i32
    %6 = arith.index_cast %5 : i32 to index
    %c0 = arith.constant 0 : index
    %7 = vector.load %arg2[%6, %c0] : memref<16x128xf32, #tpu.memory_space<vmem>>, vector<8x128xf32>
    %8 = arith.index_cast %5 : i32 to index
    %c0_2 = arith.constant 0 : index
    %9 = vector.load %arg3[%8, %c0_2] : memref<16x128xf32, #tpu.memory_space<vmem>>, vector<8x128xf32>
    %cst_3 = arith.constant 5.000000e-01 : f32
    %10 = vector.broadcast %cst_3 : f32 to vector<8x128xf32>
    %11 = arith.mulf %10, %7 : vector<8x128xf32>
    %12 = math.tanh %11 : vector<8x128xf32>
    %cst_4 = arith.constant 5.000000e-01 : f32
    %13 = vector.broadcast %cst_4 : f32 to vector<8x128xf32>
    %14 = arith.mulf %13, %12 : vector<8x128xf32>
    %cst_5 = arith.constant 5.000000e-01 : f32
    %15 = vector.broadcast %cst_5 : f32 to vector<8x128xf32>
    %16 = arith.addf %15, %14 : vector<8x128xf32>
    %17 = math.absf %12 : vector<8x128xf32>
    %cst_6 = arith.constant 5.000000e-01 : f32
    %18 = vector.broadcast %cst_6 : f32 to vector<8x128xf32>
    %19 = arith.mulf %18, %17 : vector<8x128xf32>
    %cst_7 = arith.constant 5.000000e-01 : f32
    %20 = vector.broadcast %cst_7 : f32 to vector<8x128xf32>
    %21 = arith.addf %20, %19 : vector<8x128xf32>
    %cst_8 = arith.constant 0.000000e+00 : f32
    %22 = vector.broadcast %cst_8 : f32 to vector<8x128xf32>
    %23 = arith.maximumf %7, %22 : vector<8x128xf32>
    %24 = arith.mulf %7, %9 : vector<8x128xf32>
    %25 = arith.subf %23, %24 : vector<8x128xf32>
    %26 = math.log %21 : vector<8x128xf32>
    %27 = arith.subf %25, %26 : vector<8x128xf32>
    %28 = arith.addf %3, %27 : vector<8x128xf32>
    %29 = arith.mulf %16, %9 : vector<8x128xf32>
    %30 = arith.addf %3, %29 : vector<8x128xf32>
    %31 = arith.addf %3, %16 : vector<8x128xf32>
    %32 = arith.addf %3, %9 : vector<8x128xf32>
    %c1_i32 = arith.constant 1 : i32
    %c8_i32_9 = arith.constant 8 : i32
    %33 = arith.muli %c1_i32, %c8_i32_9 : i32
    %34 = tpu.assume_multiple %33, 8 : i32
    %35 = arith.index_cast %34 : i32 to index
    %c0_10 = arith.constant 0 : index
    %36 = vector.load %arg2[%35, %c0_10] : memref<16x128xf32, #tpu.memory_space<vmem>>, vector<8x128xf32>
    %37 = arith.index_cast %34 : i32 to index
    %c0_11 = arith.constant 0 : index
    %38 = vector.load %arg3[%37, %c0_11] : memref<16x128xf32, #tpu.memory_space<vmem>>, vector<8x128xf32>
    %cst_12 = arith.constant 5.000000e-01 : f32
    %39 = vector.broadcast %cst_12 : f32 to vector<8x128xf32>
    %40 = arith.mulf %39, %36 : vector<8x128xf32>
    %41 = math.tanh %40 : vector<8x128xf32>
    %cst_13 = arith.constant 5.000000e-01 : f32
    %42 = vector.broadcast %cst_13 : f32 to vector<8x128xf32>
    %43 = arith.mulf %42, %41 : vector<8x128xf32>
    %cst_14 = arith.constant 5.000000e-01 : f32
    %44 = vector.broadcast %cst_14 : f32 to vector<8x128xf32>
    %45 = arith.addf %44, %43 : vector<8x128xf32>
    %46 = math.absf %41 : vector<8x128xf32>
    %cst_15 = arith.constant 5.000000e-01 : f32
    %47 = vector.broadcast %cst_15 : f32 to vector<8x128xf32>
    %48 = arith.mulf %47, %46 : vector<8x128xf32>
    %cst_16 = arith.constant 5.000000e-01 : f32
    %49 = vector.broadcast %cst_16 : f32 to vector<8x128xf32>
    %50 = arith.addf %49, %48 : vector<8x128xf32>
    %cst_17 = arith.constant 0.000000e+00 : f32
    %51 = vector.broadcast %cst_17 : f32 to vector<8x128xf32>
    %52 = arith.maximumf %36, %51 : vector<8x128xf32>
    %53 = arith.mulf %36, %38 : vector<8x128xf32>
    %54 = arith.subf %52, %53 : vector<8x128xf32>
    %55 = math.log %50 : vector<8x128xf32>
    %56 = arith.subf %54, %55 : vector<8x128xf32>
    %57 = arith.addf %28, %56 : vector<8x128xf32>
    %58 = arith.mulf %45, %38 : vector<8x128xf32>
    %59 = arith.addf %30, %58 : vector<8x128xf32>
    %60 = arith.addf %31, %45 : vector<8x128xf32>
    %61 = arith.addf %32, %38 : vector<8x128xf32>
    %c2_i32 = arith.constant 2 : i32
    %c0_18 = arith.constant 0 : index
    %c0_19 = arith.constant 0 : index
    %c0_20 = arith.constant 0 : index
    %c0_21 = arith.constant 0 : index
    %62 = vector.load %arg4[%c0_18, %c0_19, %c0_20, %c0_21] : memref<1x4x8x128xf32, #tpu.memory_space<vmem>>, vector<1x1x8x128xf32>
    %63 = vector.shape_cast %62 : vector<1x1x8x128xf32> to vector<8x128xf32>
    %64 = arith.addf %63, %57 : vector<8x128xf32>
    %c0_22 = arith.constant 0 : index
    %c0_23 = arith.constant 0 : index
    %c0_24 = arith.constant 0 : index
    %c0_25 = arith.constant 0 : index
    %65 = vector.load %arg4[%c0_22, %c0_23, %c0_24, %c0_25] : memref<1x4x8x128xf32, #tpu.memory_space<vmem>>, vector<1x1x8x128xf32>
    %66 = vector.shape_cast %65 : vector<1x1x8x128xf32> to vector<8x128xf32>
    %67 = vector.shape_cast %64 : vector<8x128xf32> to vector<1x1x8x128xf32>
    tpu.vector_store %arg4[%c0_22, %c0_23, %c0_24, %c0_25], %67 {strides = array<i32>} : memref<1x4x8x128xf32, #tpu.memory_space<vmem>>, vector<1x1x8x128xf32>,
    %c0_26 = arith.constant 0 : index
    %c1 = arith.constant 1 : index
    %c0_27 = arith.constant 0 : index
    %c0_28 = arith.constant 0 : index
    %68 = vector.load %arg4[%c0_26, %c1, %c0_27, %c0_28] : memref<1x4x8x128xf32, #tpu.memory_space<vmem>>, vector<1x1x8x128xf32>
    %69 = vector.shape_cast %68 : vector<1x1x8x128xf32> to vector<8x128xf32>
    %70 = arith.addf %69, %59 : vector<8x128xf32>
    %c0_29 = arith.constant 0 : index
    %c1_30 = arith.constant 1 : index
    %c0_31 = arith.constant 0 : index
    %c0_32 = arith.constant 0 : index
    %71 = vector.load %arg4[%c0_29, %c1_30, %c0_31, %c0_32] : memref<1x4x8x128xf32, #tpu.memory_space<vmem>>, vector<1x1x8x128xf32>
    %72 = vector.shape_cast %71 : vector<1x1x8x128xf32> to vector<8x128xf32>
    %73 = vector.shape_cast %70 : vector<8x128xf32> to vector<1x1x8x128xf32>
    tpu.vector_store %arg4[%c0_29, %c1_30, %c0_31, %c0_32], %73 {strides = array<i32>} : memref<1x4x8x128xf32, #tpu.memory_space<vmem>>, vector<1x1x8x128xf32>,
    %c0_33 = arith.constant 0 : index
    %c2 = arith.constant 2 : index
    %c0_34 = arith.constant 0 : index
    %c0_35 = arith.constant 0 : index
    %74 = vector.load %arg4[%c0_33, %c2, %c0_34, %c0_35] : memref<1x4x8x128xf32, #tpu.memory_space<vmem>>, vector<1x1x8x128xf32>
    %75 = vector.shape_cast %74 : vector<1x1x8x128xf32> to vector<8x128xf32>
    %76 = arith.addf %75, %60 : vector<8x128xf32>
    %c0_36 = arith.constant 0 : index
    %c2_37 = arith.constant 2 : index
    %c0_38 = arith.constant 0 : index
    %c0_39 = arith.constant 0 : index
    %77 = vector.load %arg4[%c0_36, %c2_37, %c0_38, %c0_39] : memref<1x4x8x128xf32, #tpu.memory_space<vmem>>, vector<1x1x8x128xf32>
    %78 = vector.shape_cast %77 : vector<1x1x8x128xf32> to vector<8x128xf32>
    %79 = vector.shape_cast %76 : vector<8x128xf32> to vector<1x1x8x128xf32>
    tpu.vector_store %arg4[%c0_36, %c2_37, %c0_38, %c0_39], %79 {strides = array<i32>} : memref<1x4x8x128xf32, #tpu.memory_space<vmem>>, vector<1x1x8x128xf32>,
    %c0_40 = arith.constant 0 : index
    %c3 = arith.constant 3 : index
    %c0_41 = arith.constant 0 : index
    %c0_42 = arith.constant 0 : index
    %80 = vector.load %arg4[%c0_40, %c3, %c0_41, %c0_42] : memref<1x4x8x128xf32, #tpu.memory_space<vmem>>, vector<1x1x8x128xf32>
    %81 = vector.shape_cast %80 : vector<1x1x8x128xf32> to vector<8x128xf32>
    %82 = arith.addf %81, %61 : vector<8x128xf32>
    %c0_43 = arith.constant 0 : index
    %c3_44 = arith.constant 3 : index
    %c0_45 = arith.constant 0 : index
    %c0_46 = arith.constant 0 : index
    %83 = vector.load %arg4[%c0_43, %c3_44, %c0_45, %c0_46] : memref<1x4x8x128xf32, #tpu.memory_space<vmem>>, vector<1x1x8x128xf32>
    %84 = vector.shape_cast %83 : vector<1x1x8x128xf32> to vector<8x128xf32>
    %85 = vector.shape_cast %82 : vector<8x128xf32> to vector<1x1x8x128xf32>
    tpu.vector_store %arg4[%c0_43, %c3_44, %c0_45, %c0_46], %85 {strides = array<i32>} : memref<1x4x8x128xf32, #tpu.memory_space<vmem>>, vector<1x1x8x128xf32>,
    return
  }
  func.func @transform_0(%arg0: i32, %arg1: i32) -> (i32, i32) {
    %c1_i32 = arith.constant 1 : i32
    %0 = arith.muli %arg0, %c1_i32 : i32
    %1 = arith.addi %0, %arg1 : i32
    %c0_i32 = arith.constant 0 : i32
    %c0_i32_0 = arith.constant 0 : i32
    return %1, %c0_i32 : i32, i32
  }
  func.func @transform_1(%arg0: i32, %arg1: i32) -> (i32, i32) {
    %c1_i32 = arith.constant 1 : i32
    %0 = arith.muli %arg0, %c1_i32 : i32
    %1 = arith.addi %0, %arg1 : i32
    %c0_i32 = arith.constant 0 : i32
    %c0_i32_0 = arith.constant 0 : i32
    return %1, %c0_i32 : i32, i32
  }
  func.func @transform_2(%arg0: i32, %arg1: i32) -> (i32, i32, i32, i32) {
    %c0_i32 = arith.constant 0 : i32
    %c0_i32_0 = arith.constant 0 : i32
    %c0_i32_1 = arith.constant 0 : i32
    %c0_i32_2 = arith.constant 0 : i32
    return %arg0, %c0_i32, %c0_i32_0, %c0_i32_1 : i32, i32, i32, i32
  }
}

</mosaic_0001>

<llo_original>
// kernel: combined_loss.1
$region0: #{combined_loss.1}
  #allocation0 [shape = 'u32[]', space=smem, size = 0x4, offset = 0x4, fixed_abs, tag = 'smem constant byte address 0x4 - core index']
  #allocation1 [shape = 'u32[144,128]{1,0:T(1,128)}', space=vmem, size = 0x12000, scoped, tag = 'internal scratch']
  %s0 = inlined_call_operand.vmem [shape: f32[16,128], index: 0, kind: input, shape index: {}]
  %s1 = inlined_call_operand.vmem [shape: f32[16,128], index: 1, kind: input, shape index: {}]
  %s2 = inlined_call_operand.vmem [shape: f32[1,4,8,128], index: 2, kind: output, shape index: {}]
  %s3 = sld [smem:[#allocation0]]
  $region22: #{combined_loss.1} parent=0
    _
  %s5 = ssub.s32 1, %s3
  %s6 = scalar_select 0, %s5, %s3
  // Predicated region
  $region2: #{combined_loss.1} parent=0 // pred_check
    _
  $region3: #{combined_loss.1} parent=0 // pred_check_branch
    %8 = sbr.rel (0) target = $region5
  $region4: #{combined_loss.1} parent=0 // pred_region
    %s9 = sadd.s32 0, 0
    %s10 = smul.u32 2, %s9
    %p11 = scmp.lt.s32.totalorder %s10, 1
    %s12 = scalar_select %p11, %s10, 1
    %s13 = smul.addr %s12, 8
    %s14 = scalar_lea.vmem %s0, %s13
    %s15 = sadd.s32 0, 0
    %s16 = smul.u32 2, %s15
  $region5: #{combined_loss.1} parent=0 // pred_fallthru
    _
  // Predicated region
  $region6: #{combined_loss.1} parent=0 // pred_check
    _
  $region7: #{combined_loss.1} parent=0 // pred_check_branch
    %18 = sbr.rel (0) target = $region9
  $region8: #{combined_loss.1} parent=0 // pred_region
    %s19 = sadd.s32 0, 0
    %s20 = smul.u32 2, %s19
    %p21 = scmp.lt.s32.totalorder %s20, 1
    %s22 = scalar_select %p21, %s20, 1
    %s23 = smul.addr %s22, 8
    %s24 = scalar_lea.vmem %s1, %s23
    %s25 = sadd.s32 0, 0
    %s26 = smul.u32 2, %s25
  $region9: #{combined_loss.1} parent=0 // pred_fallthru
    _
  %s27 = sadd.s32 0, 0
  %s28 = smul.u32 2, %s27
  %p29 = scmp.lt.s32.totalorder %s28, 1
  %s30 = scalar_select %p29, %s28, 1
  %s31 = smul.addr %s30, 8
  %s32 = scalar_lea.vmem %s0, %s31
  %s33 = sadd.s32 0, 0
  %s34 = smul.u32 2, %s33
  %p35 = scmp.lt.s32.totalorder %s34, 1
  %s36 = scalar_select %p35, %s34, 1
  %s37 = smul.addr %s36, 8
  %s38 = scalar_lea.vmem %s1, %s37
  %s39 = sadd.s32 0, 0
  %s40 = smul.u32 2, %s39
  %p41 = scmp.lt.s32.totalorder %s40, 1
  %s42 = scalar_select %p41, %s40, 1
  %s43 = smul.addr %s42, 8
  %s44 = scalar_lea.vmem %s0, %s43
  %s45 = sadd.s32 0, 0
  %s46 = smul.u32 2, %s45
  %s47 = sadd.s32 0, 0
  %s48 = smul.u32 2, %s47
  %p49 = scmp.lt.s32.totalorder %s48, 1
  %s50 = scalar_select %p49, %s48, 1
  %s51 = smul.addr %s50, 8
  %s52 = scalar_lea.vmem %s1, %s51
  %s53 = sadd.s32 0, 0
  %s54 = smul.u32 2, %s53
  %p55 = scmp.eq.s32.totalorder 0, 0
  // Predicated region
  $region10: #{combined_loss.1} parent=0 // pred_check
    %p56 = pneg %p55
  $region11: #{combined_loss.1} parent=0 // pred_check_branch
    %58 = sbr.rel (%p56) target = $region13
  $region12: #{combined_loss.1} parent=0 // pred_region
    %59 = vst [vmem:[%s2] sm:$0xff] 0.0
    %60 = vst [vmem:[%s2 + $0x8] sm:$0xff] 0.0
    %61 = vst [vmem:[%s2 + $0x10] sm:$0xff] 0.0
    %62 = vst [vmem:[%s2 + $0x18] sm:$0xff] 0.0
  $region13: #{combined_loss.1} parent=0 // pred_fallthru
    _
  %v63 = vld [vmem:[%s44] sm:$0xff]
  %v64 = vld [vmem:[%s52] sm:$0xff]
  %v65 = vmul.f32 %v63, 0.5
  %v66 = vtanh.pop %v65
  %v67 = vmul.f32 %v66, 0.5
  %v68 = vadd.f32 %v67, 0.5
  %v69 = vand.u32 2147483647, %v66
  %v70 = vmul.f32 %v69, 0.5
  %v71 = vadd.f32 %v70, 0.5
  %v72 = vmax.f32 %v63, 0.0
  %v73 = vmul.f32 %v63, %v64
  %v74 = vsub.f32 %v72, %v73
  %v75 = vlog2.pop %v71
  %v76 = vmul.f32 %v75, 0.6931472
  %v77 = vsub.f32 %v74, %v76
  %v78 = vadd.f32 %v77, 0.0
  %v79 = vmul.f32 %v68, %v64
  %v80 = vadd.f32 %v79, 0.0
  %v81 = vadd.f32 %v68, 0.0
  %v82 = vadd.f32 %v64, 0.0
  %s83 = scalar_lea.vmem %s44, 8
  %v84 = vld [vmem:[%s83] sm:$0xff]
  %s85 = scalar_lea.vmem %s52, 8
  %v86 = vld [vmem:[%s85] sm:$0xff]
  %v87 = vmul.f32 %v84, 0.5
  %v88 = vtanh.pop %v87
  %v89 = vmul.f32 %v88, 0.5
  %v90 = vadd.f32 %v89, 0.5
  %v91 = vand.u32 2147483647, %v88
  %v92 = vmul.f32 %v91, 0.5
  %v93 = vadd.f32 %v92, 0.5
  %v94 = vmax.f32 %v84, 0.0
  %v95 = vmul.f32 %v84, %v86
  %v96 = vsub.f32 %v94, %v95
  %v97 = vlog2.pop %v93
  %v98 = vmul.f32 %v97, 0.6931472
  %v99 = vsub.f32 %v96, %v98
  %v100 = vadd.f32 %v78, %v99
  %v101 = vmul.f32 %v90, %v86
  %v102 = vadd.f32 %v80, %v101
  %v103 = vadd.f32 %v81, %v90
  %v104 = vadd.f32 %v82, %v86
  %v105 = vld [vmem:[%s2] sm:$0xff]
  %v106 = vadd.f32 %v105, %v100
  %107 = vst [vmem:[%s2] sm:$0xff] %v106
  %s108 = scalar_lea.vmem %s2, 8
  %v109 = vld [vmem:[%s108] sm:$0xff]
  %v110 = vadd.f32 %v109, %v102
  %111 = vst [vmem:[%s108] sm:$0xff] %v110
  %s112 = scalar_lea.vmem %s2, 16
  %v113 = vld [vmem:[%s112] sm:$0xff]
  %v114 = vadd.f32 %v113, %v103
  %115 = vst [vmem:[%s112] sm:$0xff] %v114
  %s116 = scalar_lea.vmem %s2, 24
  %v117 = vld [vmem:[%s116] sm:$0xff]
  %v118 = vadd.f32 %v117, %v104
  %119 = vst [vmem:[%s116] sm:$0xff] %v118
  // Predicated region
  $region14: #{combined_loss.1} parent=0 // pred_check
    _
  $region15: #{combined_loss.1} parent=0 // pred_check_branch
    %121 = sbr.rel (0) target = $region17
  $region16: #{combined_loss.1} parent=0 // pred_region
    _
  $region17: #{combined_loss.1} parent=0 // pred_fallthru
    _
  // Predicated region
  $region18: #{combined_loss.1} parent=0 // pred_check
    _
  $region19: #{combined_loss.1} parent=0 // pred_check_branch
    %123 = sbr.rel (0) target = $region21
  $region20: #{combined_loss.1} parent=0 // pred_region
    _
  $region21: #{combined_loss.1} parent=0 // pred_fallthru
    _

</llo_original>
